<compile_context>
chip_gen: v5e
topology: v5e:2x2
jax: 0.10.0
libtpu: 0.0.40
codegen_flags: <defaults>
</compile_context>

<pallas_src>
import jax
import jax.numpy as jnp
from jax import lax
from jax.experimental import pallas as pl
from jax.experimental.pallas import tpu as pltpu

NEG_INF = -1e30  # matches masked_softmax's (1 - mask) * -1e30


def _bidaf_attention_kernel(c_ref, q_ref, cmask_ref, qmask_ref, w_ref, bias_ref,
                            o_ref):
    """One batch element per grid step.

    Block shapes:
      c_ref     : (1, Lc, H)
      q_ref     : (1, Lq, H)
      cmask_ref : (1, Lc, 1)   float {0,1}
      qmask_ref : (1, 1, Lq)   float {0,1}
      w_ref     : (3, H)       rows = [cq_weight, q_weight^T, c_weight^T]
      bias_ref  : (1, 1)
      o_ref     : (1, Lc, 4*H) = [c, a, c*a, c*b]
    """
    c = c_ref[0]                 # (Lc, H)
    q = q_ref[0]                 # (Lq, H)
    cm = cmask_ref[0]            # (Lc, 1)
    qm = qmask_ref[0]            # (1, Lq)

    w_cq = w_ref[0:1, :]         # (1, H)
    w_q = w_ref[1:2, :]          # (1, H)
    w_c = w_ref[2:3, :]          # (1, H)
    bias = bias_ref[...]         # (1, 1)

    # Similarity matrix, fused:
    #   s[i, j] = sum_h (c[i,h]*cq_w[h] + q_w[h]) * q[j,h]   (= s2 + s1, one MXU pass)
    #           + sum_h  c[i,h]*c_w[h]                        (= s0, VPU+reduce, bcast over j)
    #           + bias
    c_mod = c * w_cq + w_q                                            # (Lc, H)
    s = lax.dot_general(c_mod, q, (((1,), (1,)), ((), ())),
                        preferred_element_type=jnp.float32)           # (Lc, Lq)
    s0 = jnp.sum(c * w_c, axis=-1, keepdims=True)                     # (Lc, 1)
    s = s + s0 + bias

    # masked softmax over the query axis (dim=2 of the (B, Lc, Lq) tensor)
    sq = qm * s + (1.0 - qm) * NEG_INF
    sq = sq - jnp.max(sq, axis=1, keepdims=True)
    eq = jnp.exp(sq)
    p1 = eq / jnp.sum(eq, axis=1, keepdims=True)                      # (Lc, Lq)

    # masked softmax over the context axis (dim=1)
    sc = cm * s + (1.0 - cm) * NEG_INF
    sc = sc - jnp.max(sc, axis=0, keepdims=True)
    ec = jnp.exp(sc)
    p2 = ec / jnp.sum(ec, axis=0, keepdims=True)                      # (Lc, Lq)

    # a = s1 @ q ; b = (s1 @ s2^T) @ c
    a = jnp.dot(p1, q, preferred_element_type=jnp.float32)            # (Lc, H)
    ss = lax.dot_general(p1, p2, (((1,), (1,)), ((), ())),
                         preferred_element_type=jnp.float32)          # (Lc, Lc)
    b = jnp.dot(ss, c, preferred_element_type=jnp.float32)            # (Lc, H)

    # Single lane-dense (Lc, 4*H) store; no wrapper-side concatenate.
    o_ref[0] = jnp.concatenate([c, a, c * a, c * b], axis=-1)


def bidaf_attention(c, q, c_mask, q_mask, params):
    """c: (B, Lc, H), q: (B, Lq, H), masks: (B, Lc)/(B, Lq). Returns (B, Lc, 4*H)."""
    c = c.astype(jnp.float32)
    q = q.astype(jnp.float32)
    B, Lc, H = c.shape
    Lq = q.shape[1]

    # Stack the three H-sized projection weights into one (3, H) operand.
    w_stack = jnp.concatenate(
        [params["cq_weight"].reshape(1, H),
         params["q_weight"].reshape(1, H),
         params["c_weight"].reshape(1, H)], axis=0).astype(jnp.float32)
    bias = params["bias"].reshape(1, 1).astype(jnp.float32)

    # Cheap (bitcast) reshapes of the masks into their broadcast layouts.
    cm = c_mask.astype(jnp.float32).reshape(B, Lc, 1)
    qm = q_mask.astype(jnp.float32).reshape(B, 1, Lq)

    grid_spec = pltpu.PrefetchScalarGridSpec(
        num_scalar_prefetch=0,
        grid=(B,),
        in_specs=[
            pl.BlockSpec((1, Lc, H), lambda b: (b, 0, 0)),      # c
            pl.BlockSpec((1, Lq, H), lambda b: (b, 0, 0)),      # q
            pl.BlockSpec((1, Lc, 1), lambda b: (b, 0, 0)),      # c_mask
            pl.BlockSpec((1, 1, Lq), lambda b: (b, 0, 0)),      # q_mask
            pl.BlockSpec((3, H), lambda b: (0, 0)),             # stacked weights
            pl.BlockSpec((1, 1), lambda b: (0, 0)),             # bias
        ],
        out_specs=pl.BlockSpec((1, Lc, 4 * H), lambda b: (b, 0, 0)),
    )

    return pl.pallas_call(
        _bidaf_attention_kernel,
        out_shape=jax.ShapeDtypeStruct((B, Lc, 4 * H), jnp.float32),
        grid_spec=grid_spec,
        compiler_params=pltpu.CompilerParams(
            dimension_semantics=("parallel",)),
    )(c, q, cm, qm, w_stack, bias)


def _ref_forward(c, q, c_mask, q_mask, params):
    """Plain-JAX reference mirroring the PyTorch forward (eval mode)."""
    B, Lc, H = c.shape
    Lq = q.shape[1]
    c_w, q_w, cq_w = params["c_weight"], params["q_weight"], params["cq_weight"]
    bias = params["bias"]

    s0 = jnp.matmul(c, c_w)                                  # (B, Lc, 1)
    s1 = jnp.swapaxes(jnp.matmul(q, q_w), 1, 2)              # (B, 1, Lq)
    s2 = jnp.matmul(c * cq_w, jnp.swapaxes(q, 1, 2))         # (B, Lc, Lq)
    s = s0 + s1 + s2 + bias

    cm = c_mask.astype(jnp.float32).reshape(B, Lc, 1)
    qm = q_mask.astype(jnp.float32).reshape(B, 1, Lq)

    def masked_softmax(logits, mask, axis):
        ml = mask * logits + (1.0 - mask) * NEG_INF
        ml = ml - ml.max(axis=axis, keepdims=True)
        e = jnp.exp(ml)
        return e / e.sum(axis=axis, keepdims=True)

    p1 = masked_softmax(s, qm, 2)
    p2 = masked_softmax(s, cm, 1)
    a = jnp.matmul(p1, q)
    b = jnp.matmul(jnp.matmul(p1, jnp.swapaxes(p2, 1, 2)), c)
    return jnp.concatenate([c, a, c * a, c * b], axis=2)


def make_params(key, hidden_size):
    """Deterministic synthetic parameters (xavier-uniform like the module)."""
    ks = jax.random.split(key, 4)
    lim = (6.0 / (hidden_size + 1)) ** 0.5
    c_w = jax.random.uniform(ks[0], (hidden_size, 1), jnp.float32, -lim, lim)
    q_w = jax.random.uniform(ks[1], (hidden_size, 1), jnp.float32, -lim, lim)
    cq_w = jax.random.uniform(ks[2], (1, 1, hidden_size), jnp.float32, -lim, lim)
    bias = 0.1 * jax.random.normal(ks[3], (1,), jnp.float32)
    return dict(c_weight=c_w, q_weight=q_w, cq_weight=cq_w, bias=bias)


if __name__ == "__main__":
    B, Lc, Lq, H = 2, 16, 8, 32

    key = jax.random.PRNGKey(0)
    kc, kq, kp = jax.random.split(key, 3)
    c = jax.random.normal(kc, (B, Lc, H), jnp.float32)
    q = jax.random.normal(kq, (B, Lq, H), jnp.float32)

    c_lens = jnp.array([16, 12], jnp.int32)
    q_lens = jnp.array([8, 5], jnp.int32)
    c_mask = (jnp.arange(Lc)[None, :] < c_lens[:, None]).astype(jnp.float32)
    q_mask = (jnp.arange(Lq)[None, :] < q_lens[:, None]).astype(jnp.float32)

    params = make_params(kp, H)

    out = bidaf_attention(c, q, c_mask, q_mask, params)
    out = jax.block_until_ready(out)

    ref = _ref_forward(c, q, c_mask, q_mask, params)
    assert out.shape == (B, Lc, 4 * H), out.shape
    max_err = float(jnp.max(jnp.abs(out - ref)))
    assert jnp.allclose(out, ref, atol=1e-3, rtol=1e-3), max_err

    print("KERNEL_OK")
</pallas_src>

<mosaic_0001>
module attributes {stable_mosaic.version = 11 : i64} {
  func.func @_bidaf_attention_kernel(%arg0: i32, %arg1: memref<1x16x32xf32, #tpu.memory_space<vmem>>, %arg2: memref<1x8x32xf32, #tpu.memory_space<vmem>>, %arg3: memref<1x16x1xf32, #tpu.memory_space<vmem>>, %arg4: memref<1x1x8xf32, #tpu.memory_space<vmem>>, %arg5: memref<3x32xf32, #tpu.memory_space<vmem>>, %arg6: memref<1x1xf32, #tpu.memory_space<vmem>>, %arg7: memref<1x16x128xf32, #tpu.memory_space<vmem>>) attributes {dimension_semantics = [#tpu.dimension_semantics<parallel>], iteration_bounds = array<i64: 2>, scalar_prefetch = 0 : i64, scratch_operands = 0 : i64, tpu.core_type = #tpu.core_type<tc>, window_params = [{transform_indices = @transform_0, window_bounds = array<i64: 1, 16, 32>}, {transform_indices = @transform_1, window_bounds = array<i64: 1, 8, 32>}, {transform_indices = @transform_2, window_bounds = array<i64: 1, 16, 1>}, {transform_indices = @transform_3, window_bounds = array<i64: 1, 1, 8>}, {pipeline_mode = #tpu.pipeline_mode<synchronous>, transform_indices = @transform_4, window_bounds = array<i64: 3, 32>}, {pipeline_mode = #tpu.pipeline_mode<synchronous>, transform_indices = @transform_5, window_bounds = array<i64: 1, 1>}, {transform_indices = @transform_6, window_bounds = array<i64: 1, 16, 128>}]} {
    %c0 = arith.constant 0 : index
    %c0_0 = arith.constant 0 : index
    %c0_1 = arith.constant 0 : index
    %0 = vector.load %arg1[%c0, %c0_0, %c0_1] : memref<1x16x32xf32, #tpu.memory_space<vmem>>, vector<1x16x32xf32>
    %1 = vector.shape_cast %0 : vector<1x16x32xf32> to vector<16x32xf32>
    %c0_2 = arith.constant 0 : index
    %c0_3 = arith.constant 0 : index
    %c0_4 = arith.constant 0 : index
    %2 = vector.load %arg2[%c0_2, %c0_3, %c0_4] : memref<1x8x32xf32, #tpu.memory_space<vmem>>, vector<1x8x32xf32>
    %3 = vector.shape_cast %2 : vector<1x8x32xf32> to vector<8x32xf32>
    %c0_5 = arith.constant 0 : index
    %c0_6 = arith.constant 0 : index
    %c0_7 = arith.constant 0 : index
    %4 = vector.load %arg3[%c0_5, %c0_6, %c0_7] : memref<1x16x1xf32, #tpu.memory_space<vmem>>, vector<1x16x1xf32>
    %5 = vector.shape_cast %4 : vector<1x16x1xf32> to vector<16x1xf32>
    %c0_8 = arith.constant 0 : index
    %c0_9 = arith.constant 0 : index
    %c0_10 = arith.constant 0 : index
    %6 = vector.load %arg4[%c0_8, %c0_9, %c0_10] : memref<1x1x8xf32, #tpu.memory_space<vmem>>, vector<1x1x8xf32>
    %7 = vector.shape_cast %6 : vector<1x1x8xf32> to vector<1x8xf32>
    %c0_11 = arith.constant 0 : index
    %c0_12 = arith.constant 0 : index
    %8 = vector.load %arg5[%c0_11, %c0_12] : memref<3x32xf32, #tpu.memory_space<vmem>>, vector<1x32xf32>
    %c1 = arith.constant 1 : index
    %c0_13 = arith.constant 0 : index
    %9 = vector.load %arg5[%c1, %c0_13] : memref<3x32xf32, #tpu.memory_space<vmem>>, vector<1x32xf32>
    %c2 = arith.constant 2 : index
    %c0_14 = arith.constant 0 : index
    %10 = vector.load %arg5[%c2, %c0_14] : memref<3x32xf32, #tpu.memory_space<vmem>>, vector<1x32xf32>
    %c0_15 = arith.constant 0 : index
    %c0_16 = arith.constant 0 : index
    %11 = vector.load %arg6[%c0_15, %c0_16] : memref<1x1xf32, #tpu.memory_space<vmem>>, vector<1x1xf32>
    %12 = vector.broadcast %8 : vector<1x32xf32> to vector<16x32xf32>
    %13 = arith.mulf %1, %12 : vector<16x32xf32>
    %14 = vector.broadcast %9 : vector<1x32xf32> to vector<16x32xf32>
    %15 = arith.addf %13, %14 : vector<16x32xf32>
    %cst = arith.constant dense<0.000000e+00> : vector<16x8xf32>
    %16 = tpu.matmul %15, %3, %cst {dimension_numbers = #tpu.dot_dimension_numbers<[1], [1], [0], [0], [0, 0, 1, 0], [], []>} : vector<16x32xf32>, vector<8x32xf32>, vector<16x8xf32> -> vector<16x8xf32>
    %17 = vector.broadcast %10 : vector<1x32xf32> to vector<16x32xf32>
    %18 = arith.mulf %1, %17 : vector<16x32xf32>
    %cst_17 = arith.constant dense<0.000000e+00> : vector<16xf32>
    %19 = vector.multi_reduction <add>, %18, %cst_17 [1] : vector<16x32xf32> to vector<16xf32>
    %20 = vector.shape_cast %19 : vector<16xf32> to vector<16x1xf32>
    %21 = vector.broadcast %20 : vector<16x1xf32> to vector<16x8xf32>
    %22 = arith.addf %16, %21 : vector<16x8xf32>
    %23 = vector.broadcast %11 : vector<1x1xf32> to vector<16x8xf32>
    %24 = arith.addf %22, %23 : vector<16x8xf32>
    %25 = vector.broadcast %7 : vector<1x8xf32> to vector<16x8xf32>
    %26 = arith.mulf %25, %24 : vector<16x8xf32>
    %cst_18 = arith.constant 1.000000e+00 : f32
    %27 = vector.broadcast %cst_18 : f32 to vector<1x8xf32>
    %28 = arith.subf %27, %7 : vector<1x8xf32>
    %cst_19 = arith.constant -1.000000e+30 : f32
    %29 = vector.broadcast %cst_19 : f32 to vector<1x8xf32>
    %30 = arith.mulf %28, %29 : vector<1x8xf32>
    %31 = vector.broadcast %30 : vector<1x8xf32> to vector<16x8xf32>
    %32 = arith.addf %26, %31 : vector<16x8xf32>
    %cst_20 = arith.constant dense<0xFF800000> : vector<16xf32>
    %33 = vector.multi_reduction <maximumf>, %32, %cst_20 [1] : vector<16x8xf32> to vector<16xf32>
    %34 = vector.shape_cast %33 : vector<16xf32> to vector<16x1xf32>
    %35 = vector.broadcast %34 : vector<16x1xf32> to vector<16x8xf32>
    %36 = arith.subf %32, %35 : vector<16x8xf32>
    %37 = math.exp %36 : vector<16x8xf32>
    %cst_21 = arith.constant dense<0.000000e+00> : vector<16xf32>
    %38 = vector.multi_reduction <add>, %37, %cst_21 [1] : vector<16x8xf32> to vector<16xf32>
    %39 = vector.shape_cast %38 : vector<16xf32> to vector<16x1xf32>
    %40 = vector.broadcast %39 : vector<16x1xf32> to vector<16x8xf32>
    %41 = arith.divf %37, %40 : vector<16x8xf32>
    %42 = vector.broadcast %5 : vector<16x1xf32> to vector<16x8xf32>
    %43 = arith.mulf %42, %24 : vector<16x8xf32>
    %cst_22 = arith.constant 1.000000e+00 : f32
    %44 = vector.broadcast %cst_22 : f32 to vector<16x1xf32>
    %45 = arith.subf %44, %5 : vector<16x1xf32>
    %cst_23 = arith.constant -1.000000e+30 : f32
    %46 = vector.broadcast %cst_23 : f32 to vector<16x1xf32>
    %47 = arith.mulf %45, %46 : vector<16x1xf32>
    %48 = vector.broadcast %47 : vector<16x1xf32> to vector<16x8xf32>
    %49 = arith.addf %43, %48 : vector<16x8xf32>
    %cst_24 = arith.constant dense<0xFF800000> : vector<8xf32>
    %50 = vector.multi_reduction <maximumf>, %49, %cst_24 [0] : vector<16x8xf32> to vector<8xf32>
    %51 = vector.shape_cast %50 : vector<8xf32> to vector<1x8xf32>
    %52 = vector.broadcast %51 : vector<1x8xf32> to vector<16x8xf32>
    %53 = arith.subf %49, %52 : vector<16x8xf32>
    %54 = math.exp %53 : vector<16x8xf32>
    %cst_25 = arith.constant dense<0.000000e+00> : vector<8xf32>
    %55 = vector.multi_reduction <add>, %54, %cst_25 [0] : vector<16x8xf32> to vector<8xf32>
    %56 = vector.shape_cast %55 : vector<8xf32> to vector<1x8xf32>
    %57 = vector.broadcast %56 : vector<1x8xf32> to vector<16x8xf32>
    %58 = arith.divf %54, %57 : vector<16x8xf32>
    %cst_26 = arith.constant dense<0.000000e+00> : vector<16x32xf32>
    %59 = tpu.matmul %41, %3, %cst_26 {dimension_numbers = #tpu.dot_dimension_numbers<[1], [0], [0], [1], [0, 0, 1, 1], [], []>} : vector<16x8xf32>, vector<8x32xf32>, vector<16x32xf32> -> vector<16x32xf32>
    %cst_27 = arith.constant dense<0.000000e+00> : vector<16x16xf32>
    %60 = tpu.matmul %41, %58, %cst_27 {dimension_numbers = #tpu.dot_dimension_numbers<[1], [1], [0], [0], [0, 0, 1, 0], [], []>} : vector<16x8xf32>, vector<16x8xf32>, vector<16x16xf32> -> vector<16x16xf32>
    %cst_28 = arith.constant dense<0.000000e+00> : vector<16x32xf32>
    %61 = tpu.matmul %60, %1, %cst_28 {dimension_numbers = #tpu.dot_dimension_numbers<[1], [0], [0], [1], [0, 0, 1, 1], [], []>} : vector<16x16xf32>, vector<16x32xf32>, vector<16x32xf32> -> vector<16x32xf32>
    %62 = arith.mulf %1, %59 : vector<16x32xf32>
    %63 = arith.mulf %1, %61 : vector<16x32xf32>
    %64 = tpu.concatenate %1, %59, %62, %63 in 1 : vector<16x32xf32>, vector<16x32xf32>, vector<16x32xf32>, vector<16x32xf32> -> vector<16x128xf32>
    %c0_29 = arith.constant 0 : index
    %c0_30 = arith.constant 0 : index
    %c0_31 = arith.constant 0 : index
    %65 = vector.load %arg7[%c0_29, %c0_30, %c0_31] : memref<1x16x128xf32, #tpu.memory_space<vmem>>, vector<1x16x128xf32>
    %66 = vector.shape_cast %65 : vector<1x16x128xf32> to vector<16x128xf32>
    %67 = vector.shape_cast %64 : vector<16x128xf32> to vector<1x16x128xf32>
    tpu.vector_store %arg7[%c0_29, %c0_30, %c0_31], %67 {strides = array<i32>} : memref<1x16x128xf32, #tpu.memory_space<vmem>>, vector<1x16x128xf32>,
    return
  }
  func.func @transform_0(%arg0: i32) -> (i32, i32, i32) {
    %c0_i32 = arith.constant 0 : i32
    %c0_i32_0 = arith.constant 0 : i32
    %c0_i32_1 = arith.constant 0 : i32
    return %arg0, %c0_i32, %c0_i32_0 : i32, i32, i32
  }
  func.func @transform_1(%arg0: i32) -> (i32, i32, i32) {
    %c0_i32 = arith.constant 0 : i32
    %c0_i32_0 = arith.constant 0 : i32
    %c0_i32_1 = arith.constant 0 : i32
    return %arg0, %c0_i32, %c0_i32_0 : i32, i32, i32
  }
  func.func @transform_2(%arg0: i32) -> (i32, i32, i32) {
    %c0_i32 = arith.constant 0 : i32
    %c0_i32_0 = arith.constant 0 : i32
    %c0_i32_1 = arith.constant 0 : i32
    return %arg0, %c0_i32, %c0_i32_0 : i32, i32, i32
  }
  func.func @transform_3(%arg0: i32) -> (i32, i32, i32) {
    %c0_i32 = arith.constant 0 : i32
    %c0_i32_0 = arith.constant 0 : i32
    %c0_i32_1 = arith.constant 0 : i32
    return %arg0, %c0_i32, %c0_i32_0 : i32, i32, i32
  }
  func.func @transform_4(%arg0: i32) -> (i32, i32) {
    %c0_i32 = arith.constant 0 : i32
    %c0_i32_0 = arith.constant 0 : i32
    %c0_i32_1 = arith.constant 0 : i32
    return %c0_i32, %c0_i32_0 : i32, i32
  }
  func.func @transform_5(%arg0: i32) -> (i32, i32) {
    %c0_i32 = arith.constant 0 : i32
    %c0_i32_0 = arith.constant 0 : i32
    %c0_i32_1 = arith.constant 0 : i32
    return %c0_i32, %c0_i32_0 : i32, i32
  }
  func.func @transform_6(%arg0: i32) -> (i32, i32, i32) {
    %c0_i32 = arith.constant 0 : i32
    %c0_i32_0 = arith.constant 0 : i32
    %c0_i32_1 = arith.constant 0 : i32
    return %arg0, %c0_i32, %c0_i32_0 : i32, i32, i32
  }
}

</mosaic_0001>

<llo_original>
// kernel: tpu_custom_call.1
$region0: #{tpu_custom_call.1}
  #allocation0 [shape = 'u32[]', space=smem, size = 0x4, offset = 0x4, fixed_abs, tag = 'smem constant byte address 0x4 - core index']
  #allocation1 [shape = 'u32[72,128]{1,0:T(1,128)}', space=vmem, size = 0x9000, scoped, tag = 'internal scratch']
  #allocation2 [shape = 'f32[1,1]{1,0:T(1,128)S(1)}', space=vmem, size = 0x200, scoped, tag = 'scoped memory for tpu_custom_call.1']
  %s0 = inlined_call_operand.vmem [shape: f32[2,16,32], index: 0, kind: input, shape index: {}]
  %s1 = inlined_call_operand.hbm [shape: f32[2,8,32], index: 1, kind: input, shape index: {}]
  %s2 = inlined_call_operand.vmem [shape: f32[2,16,1], index: 2, kind: input, shape index: {}]
  %s3 = inlined_call_operand.vmem [shape: f32[2,1,8], index: 3, kind: input, shape index: {}]
  %s4 = inlined_call_operand.hbm [shape: f32[3,32], index: 4, kind: input, shape index: {}]
  %s5 = inlined_call_operand.<no memory space> [shape: f32[1,1], index: 5, kind: input, shape index: {}]
  %s6 = inlined_call_operand.hbm [shape: f32[2,16,128], index: 6, kind: output, shape index: {}]
  %s7 = sld [smem:[#allocation0]]
  $region65: #{tpu_custom_call.1} parent=0
    _
  %s9 = ssub.s32 1, %s7
  %s10 = scalar_select 0, %s9, %s7
  %v11 = vstv %s5
  %12 = vst [vmem:[#allocation2] sm:$0x1] %v11
  $region1: #{tpu_custom_call.1} parent=0
    #allocation3 [shape = 'u8[8192]{0}', space=vmem, size = 0x2000, scoped, tag = 'input window, operand 1']
    #allocation4 [shape = 's32[2]{0}', space=sflag, size = 0x8, scoped, tag = 'scoped memory for tpu_custom_call.1']
    #allocation5 [shape = 's32[2]{0}', space=sflag, size = 0x8, scoped, tag = 'scoped memory for tpu_custom_call.1']
    #allocation6 [shape = 'u8[2048]{0}', space=vmem, size = 0x800, scoped, tag = 'input window, operand 4, single buffered']
    #allocation7 [shape = 's32[1]{0}', space=sflag, size = 0x4, scoped, tag = 'scoped memory for tpu_custom_call.1']
    #allocation8 [shape = 'u8[16384]{0}', space=vmem, size = 0x4000, scoped, tag = 'output window, operand 0']
    %13 = vsyncpa [#allocation4], 0
    %s14 = scalar_lea.sflag [#allocation4], 1
    %15 = vsyncpa %s14, 0
    %16 = vsyncpa [#allocation7], 0
    %17 = vsyncpa [#allocation5], 0
    %s18 = scalar_lea.sflag [#allocation5], 1
    %19 = vsyncpa %s18, 0
    loop: start=0, step=1, limit=4
    $region2: #{tpu_custom_call.1} parent=1 // loop_pre_header
      _
    $region3: #{tpu_custom_call.1} parent=1 // loop_header
      %s21 = sphi 0, %s25
      %p22 = scmp.ge.s32.totalorder %s21, 4
      %s31 = sphi 0, %s33
      %s34 = sphi 0, %s31
      %s35 = sphi 0, %s34
      %s51 = sphi 0, %s35
      %s57 = sphi 0, %s59
      %s60 = sphi 0, %s57
      %s61 = sphi 0, %s60
      %s77 = sphi 0, %s61
      %s83 = sphi 0, %s85
      %s86 = sphi 0, %s83
      %s87 = sphi 0, %s86
      %s103 = sphi 0, %s87
      %s109 = sphi 0, %s111
      %s112 = sphi 0, %s109
      %s113 = sphi 0, %s112
      %s129 = sphi 0, %s113
      %s133 = sphi 0, %s133
      %s135 = sphi 0, %s133
      %s136 = sphi 0, %s135
      %s150 = sphi 0, %s136
      %s154 = sphi 0, %s154
      %s156 = sphi 0, %s154
      %s157 = sphi 0, %s156
      %s171 = sphi 0, %s157
      %s177 = sphi 0, %s179
      %s180 = sphi 0, %s177
      %s181 = sphi 0, %s180
      %s197 = sphi 0, %s181
    $region4: #{tpu_custom_call.1} parent=1 // loop_header_branch
      %24 = sbr.rel (%p22) target = $region8
    $region5: #{tpu_custom_call.1} parent=1 // loop_body
      %s26 = ssub.s32 %s21, 1
      %s27 = ssub.s32 %s21, 2
      %s28 = sadd.s32 %s21, 1
      %s29 = ssub.s32 %s21, %s28
      %p30 = scmp.eq.s32.totalorder %s29, 0
      %s32 = sadd.s32 %s31, 1
      %s33 = scalar_select %p30, %s31, %s32
      %p36 = pneg %p30
      %p37 = scmp.eq.s32.totalorder %s21, 1
      %p38 = por %p36, %p37
      %p39 = scmp.ne.s32.totalorder %s31, %s34
      %p40 = scmp.eq.s32.totalorder %s21, 0
      %p41 = por %p39, %p40
      %p42 = scmp.ne.s32.totalorder %s31, %s34
      %p43 = scmp.eq.s32.totalorder %s26, 1
      %p44 = por %p42, %p43
      %p45 = scmp.ne.s32.totalorder %s34, %s35
      %p46 = scmp.eq.s32.totalorder %s26, 0
      %p47 = por %p45, %p46
      %p48 = scmp.ne.s32.totalorder %s34, %s35
      %p49 = scmp.eq.s32.totalorder %s27, 1
      %p50 = por %p48, %p49
      %p52 = scmp.ne.s32.totalorder %s35, %s51
      %p53 = scmp.eq.s32.totalorder %s27, 0
      %p54 = por %p52, %p53
      %s55 = ssub.s32 %s21, %s28
      %p56 = scmp.eq.s32.totalorder %s55, 0
      %s58 = sadd.s32 %s57, 1
      %s59 = scalar_select %p56, %s57, %s58
      %p62 = pneg %p56
      %p63 = scmp.eq.s32.totalorder %s21, 1
      %p64 = por %p62, %p63
      %p65 = scmp.ne.s32.totalorder %s57, %s60
      %p66 = scmp.eq.s32.totalorder %s21, 0
      %p67 = por %p65, %p66
      %p68 = scmp.ne.s32.totalorder %s57, %s60
      %p69 = scmp.eq.s32.totalorder %s26, 1
      %p70 = por %p68, %p69
      %p71 = scmp.ne.s32.totalorder %s60, %s61
      %p72 = scmp.eq.s32.totalorder %s26, 0
      %p73 = por %p71, %p72
      %p74 = scmp.ne.s32.totalorder %s60, %s61
      %p75 = scmp.eq.s32.totalorder %s27, 1
      %p76 = por %p74, %p75
      %p78 = scmp.ne.s32.totalorder %s61, %s77
      %p79 = scmp.eq.s32.totalorder %s27, 0
      %p80 = por %p78, %p79
      %s81 = ssub.s32 %s21, %s28
      %p82 = scmp.eq.s32.totalorder %s81, 0
      %s84 = sadd.s32 %s83, 1
      %s85 = scalar_select %p82, %s83, %s84
      %p88 = pneg %p82
      %p89 = scmp.eq.s32.totalorder %s21, 1
      %p90 = por %p88, %p89
      %p91 = scmp.ne.s32.totalorder %s83, %s86
      %p92 = scmp.eq.s32.totalorder %s21, 0
      %p93 = por %p91, %p92
      %p94 = scmp.ne.s32.totalorder %s83, %s86
      %p95 = scmp.eq.s32.totalorder %s26, 1
      %p96 = por %p94, %p95
      %p97 = scmp.ne.s32.totalorder %s86, %s87
      %p98 = scmp.eq.s32.totalorder %s26, 0
      %p99 = por %p97, %p98
      %p100 = scmp.ne.s32.totalorder %s86, %s87
      %p101 = scmp.eq.s32.totalorder %s27, 1
      %p102 = por %p100, %p101
      %p104 = scmp.ne.s32.totalorder %s87, %s103
      %p105 = scmp.eq.s32.totalorder %s27, 0
      %p106 = por %p104, %p105
      %s107 = ssub.s32 %s21, %s28
      %p108 = scmp.eq.s32.totalorder %s107, 0
      %s110 = sadd.s32 %s109, 1
      %s111 = scalar_select %p108, %s109, %s110
      %p114 = pneg %p108
      %p115 = scmp.eq.s32.totalorder %s21, 1
      %p116 = por %p114, %p115
      %p117 = scmp.ne.s32.totalorder %s109, %s112
      %p118 = scmp.eq.s32.totalorder %s21, 0
      %p119 = por %p117, %p118
      %p120 = scmp.ne.s32.totalorder %s109, %s112
      %p121 = scmp.eq.s32.totalorder %s26, 1
      %p122 = por %p120, %p121
      %p123 = scmp.ne.s32.totalorder %s112, %s113
      %p124 = scmp.eq.s32.totalorder %s26, 0
      %p125 = por %p123, %p124
      %p126 = scmp.ne.s32.totalorder %s112, %s113
      %p127 = scmp.eq.s32.totalorder %s27, 1
      %p128 = por %p126, %p127
      %p130 = scmp.ne.s32.totalorder %s113, %s129
      %p131 = scmp.eq.s32.totalorder %s27, 0
      %p132 = por %p130, %p131
      %s134 = sadd.s32 %s133, 1
      %p137 = scmp.eq.s32.totalorder %s21, 1
      %p138 = scmp.ne.s32.totalorder %s133, %s135
      %p139 = scmp.eq.s32.totalorder %s21, 0
      %p140 = por %p138, %p139
      %p141 = scmp.ne.s32.totalorder %s133, %s135
      %p142 = scmp.eq.s32.totalorder %s26, 1
      %p143 = por %p141, %p142
      %p144 = scmp.ne.s32.totalorder %s135, %s136
      %p145 = scmp.eq.s32.totalorder %s26, 0
      %p146 = por %p144, %p145
      %p147 = scmp.ne.s32.totalorder %s135, %s136
      %p148 = scmp.eq.s32.totalorder %s27, 1
      %p149 = por %p147, %p148
      %p151 = scmp.ne.s32.totalorder %s136, %s150
      %p152 = scmp.eq.s32.totalorder %s27, 0
      %p153 = por %p151, %p152
      %s155 = sadd.s32 %s154, 1
      %p158 = scmp.eq.s32.totalorder %s21, 1
      %p159 = scmp.ne.s32.totalorder %s154, %s156
      %p160 = scmp.eq.s32.totalorder %s21, 0
      %p161 = por %p159, %p160
      %p162 = scmp.ne.s32.totalorder %s154, %s156
      %p163 = scmp.eq.s32.totalorder %s26, 1
      %p164 = por %p162, %p163
      %p165 = scmp.ne.s32.totalorder %s156, %s157
      %p166 = scmp.eq.s32.totalorder %s26, 0
      %p167 = por %p165, %p166
      %p168 = scmp.ne.s32.totalorder %s156, %s157
      %p169 = scmp.eq.s32.totalorder %s27, 1
      %p170 = por %p168, %p169
      %p172 = scmp.ne.s32.totalorder %s157, %s171
      %p173 = scmp.eq.s32.totalorder %s27, 0
      %p174 = por %p172, %p173
      %s175 = ssub.s32 %s21, %s28
      %p176 = scmp.eq.s32.totalorder %s175, 0
      %s178 = sadd.s32 %s177, 1
      %s179 = scalar_select %p176, %s177, %s178
      %p182 = pneg %p176
      %p183 = scmp.eq.s32.totalorder %s21, 1
      %p184 = por %p182, %p183
      %p185 = scmp.ne.s32.totalorder %s177, %s180
      %p186 = scmp.eq.s32.totalorder %s21, 0
      %p187 = por %p185, %p186
      %p188 = scmp.ne.s32.totalorder %s177, %s180
      %p189 = scmp.eq.s32.totalorder %s26, 1
      %p190 = por %p188, %p189
      %p191 = scmp.ne.s32.totalorder %s180, %s181
      %p192 = scmp.eq.s32.totalorder %s26, 0
      %p193 = por %p191, %p192
      %p194 = scmp.ne.s32.totalorder %s180, %s181
      %p195 = scmp.eq.s32.totalorder %s27, 1
      %p196 = por %p194, %p195
      %p198 = scmp.ne.s32.totalorder %s181, %s197
      %p199 = scmp.eq.s32.totalorder %s27, 0
      %p200 = por %p198, %p199
      %p201 = scmp.le.s32.totalorder 1, %s21
      %p202 = scmp.lt.s32.totalorder %s21, 3
      %p203 = pnand %p201, %p202
      %p204 = pneg %p203
      // Predicated region
      $region9: #{tpu_custom_call.1} parent=5 // pred_check
        _
      $region10: #{tpu_custom_call.1} parent=5 // pred_check_branch
        %206 = sbr.rel (%p203) target = $region12
      $region11: #{tpu_custom_call.1} parent=5 // pred_region
        %s207 = ssub.s32 %s21, 1
        // Predicated region
        $region13: #{tpu_custom_call.1} parent=11 // pred_check
          %p208 = pneg %p146
        $region14: #{tpu_custom_call.1} parent=11 // pred_check_branch
          %210 = sbr.rel (%p208) target = $region16
        $region15: #{tpu_custom_call.1} parent=11 // pred_region
          %212 = vsyncadd [#allocation7], 0
          %s214 = sshll.u32 %s4, 4
          %s215 = int_to_ptr.hbm [resolvable:$true] %s214
          %s216 = sshll.u32 [#allocation6], 4
          %s217 = int_to_ptr.vmem [resolvable:$true] %s216
          %219 = dma.hbm_to_vmem [thread:$0]  %s215, 64, %s217, [#allocation7]
        $region16: #{tpu_custom_call.1} parent=11 // pred_fallthru
          _
        // Predicated region
        $region17: #{tpu_custom_call.1} parent=11 // pred_check
          %p220 = pneg %p167
        $region18: #{tpu_custom_call.1} parent=11 // pred_check_branch
          %222 = sbr.rel (%p220) target = $region20
        $region19: #{tpu_custom_call.1} parent=11 // pred_region
          _
        $region20: #{tpu_custom_call.1} parent=11 // pred_fallthru
          _
      $region12: #{tpu_custom_call.1} parent=5 // pred_fallthru
        _
      %p223 = scmp.lt.s32.totalorder %s21, 2
      // Predicated region
      $region21: #{tpu_custom_call.1} parent=5 // pred_check
        %p224 = pneg %p223
      $region22: #{tpu_custom_call.1} parent=5 // pred_check_branch
        %226 = sbr.rel (%p224) target = $region24
      $region23: #{tpu_custom_call.1} parent=5 // pred_region
        // Predicated region
        $region25: #{tpu_custom_call.1} parent=23 // pred_check
          %p227 = pneg %p41
        $region26: #{tpu_custom_call.1} parent=23 // pred_check_branch
          %229 = sbr.rel (%p227) target = $region28
        $region27: #{tpu_custom_call.1} parent=23 // pred_region
          %p230 = scmp.lt.s32.totalorder %s21, 1
          %s231 = scalar_select %p230, %s21, 1
          %s232 = smul.addr %s231, 2
          %s233 = smul.addr %s232, 8
          %s234 = scalar_lea.vmem %s0, %s233
        $region28: #{tpu_custom_call.1} parent=23 // pred_fallthru
          _
        // Predicated region
        $region29: #{tpu_custom_call.1} parent=23 // pred_check
          %p235 = pneg %p67
        $region30: #{tpu_custom_call.1} parent=23 // pred_check_branch
          %237 = sbr.rel (%p235) target = $region32
        $region31: #{tpu_custom_call.1} parent=23 // pred_region
          %s238 = sand.u32 %s57, 1
          %s239 = scalar_lea.sflag [#allocation4], %s238
          %s240 = sand.u32 %s57, 1
          %s241 = smul.addr %s240, 8
          %s242 = scalar_lea.vmem [#allocation3], %s241
          %244 = vsyncadd %s239, 0
          %s245 = smul.addr %s21, 8
          %s246 = scalar_lea.hbm %s1, %s245
          %s248 = sshll.u32 %s246, 4
          %s249 = int_to_ptr.hbm [resolvable:$true] %s248
          %s250 = sshll.u32 %s242, 4
          %s251 = int_to_ptr.vmem [resolvable:$true] %s250
          %253 = dma.hbm_to_vmem [thread:$0]  %s249, 128, %s251, %s239
        $region32: #{tpu_custom_call.1} parent=23 // pred_fallthru
          _
        // Predicated region
        $region33: #{tpu_custom_call.1} parent=23 // pred_check
          %p254 = pneg %p93
        $region34: #{tpu_custom_call.1} parent=23 // pred_check_branch
          %256 = sbr.rel (%p254) target = $region36
        $region35: #{tpu_custom_call.1} parent=23 // pred_region
          %p257 = scmp.lt.s32.totalorder %s21, 1
          %s258 = scalar_select %p257, %s21, 1
          %s259 = smul.addr %s258, 2
          %s260 = smul.addr %s259, 8
          %s261 = scalar_lea.vmem %s2, %s260
        $region36: #{tpu_custom_call.1} parent=23 // pred_fallthru
          _
        // Predicated region
        $region37: #{tpu_custom_call.1} parent=23 // pred_check
          %p262 = pneg %p119
        $region38: #{tpu_custom_call.1} parent=23 // pred_check_branch
          %264 = sbr.rel (%p262) target = $region40
        $region39: #{tpu_custom_call.1} parent=23 // pred_region
          %p265 = scmp.lt.s32.totalorder %s21, 1
          %s266 = scalar_select %p265, %s21, 1
          %s267 = scalar_lea.vmem %s3, %s266
        $region40: #{tpu_custom_call.1} parent=23 // pred_fallthru
          _
      $region24: #{tpu_custom_call.1} parent=5 // pred_fallthru
        _
      %p268 = scmp.le.s32.totalorder 1, %s21
      %p269 = scmp.lt.s32.totalorder %s21, 3
      %p270 = pnand %p268, %p269
      %p271 = pneg %p270
      // Predicated region
      $region41: #{tpu_custom_call.1} parent=5 // pred_check
        _
      $region42: #{tpu_custom_call.1} parent=5 // pred_check_branch
        %273 = sbr.rel (%p270) target = $region44
      $region43: #{tpu_custom_call.1} parent=5 // pred_region
        %s274 = ssub.s32 %s21, 1
        %s275 = sand.u32 %s60, 1
        %s276 = scalar_lea.sflag [#allocation4], %s275
        %s277 = sand.u32 %s60, 1
        %s278 = smul.addr %s277, 8
        %s279 = scalar_lea.vmem [#allocation3], %s278
        // Predicated region
        $region45: #{tpu_custom_call.1} parent=43 // pred_check
          %p280 = pneg %p73
        $region46: #{tpu_custom_call.1} parent=43 // pred_check_branch
          %282 = sbr.rel (%p280) target = $region48
        $region47: #{tpu_custom_call.1} parent=43 // pred_region
          %284 = dma.done %s276, 128
        $region48: #{tpu_custom_call.1} parent=43 // pred_fallthru
          _
        // Predicated region
        $region49: #{tpu_custom_call.1} parent=43 // pred_check
          %p285 = pneg %p146
        $region50: #{tpu_custom_call.1} parent=43 // pred_check_branch
          %287 = sbr.rel (%p285) target = $region52
        $region51: #{tpu_custom_call.1} parent=43 // pred_region
          %289 = dma.done [#allocation7], 64
        $region52: #{tpu_custom_call.1} parent=43 // pred_fallthru
          _
        %p290 = scmp.lt.s32.totalorder %s26, 1
        %s291 = scalar_select %p290, %s26, 1
        %s292 = smul.addr %s291, 2
        %s293 = smul.addr %s292, 8
        %s294 = scalar_lea.vmem %s0, %s293
        %p295 = pneg %p47
        %p296 = pneg %p44
        %s297 = sand.u32 %s60, 1
        %s298 = scalar_lea.sflag [#allocation4], %s297
        %s299 = sand.u32 %s60, 1
        %s300 = smul.addr %s299, 8
        %s301 = scalar_lea.vmem [#allocation3], %s300
        %p302 = pneg %p73
        %p303 = pneg %p70
        %p304 = scmp.lt.s32.totalorder %s26, 1
        %s305 = scalar_select %p304, %s26, 1
        %s306 = smul.addr %s305, 2
        %s307 = smul.addr %s306, 8
        %s308 = scalar_lea.vmem %s2, %s307
        %p309 = pneg %p99
        %p310 = pneg %p96
        %p311 = scmp.lt.s32.totalorder %s26, 1
        %s312 = scalar_select %p311, %s26, 1
        %s313 = scalar_lea.vmem %s3, %s312
        %p314 = pneg %p125
        %p315 = pneg %p122
        %p316 = pneg %p146
        %p317 = pneg %p143
        %p318 = pneg %p167
        %p319 = pneg %p164
        %p320 = pneg %p193
        %p321 = pneg %p190
        %s322 = sand.u32 %s180, 1
        %s323 = scalar_lea.sflag [#allocation5], %s322
        %s324 = sand.u32 %s180, 1
        %s325 = smul.addr %s324, 16
        %s326 = scalar_lea.vmem [#allocation8], %s325
        %p327 = scmp.lt.s32.totalorder %s26, 1
        %s328 = scalar_select %p327, %s26, 1
        %s329 = smul.addr %s328, 2
        %s330 = smul.addr %s329, 8
        %s331 = scalar_lea.vmem %s0, %s330
        %p332 = scmp.lt.s32.totalorder %s26, 1
        %s333 = scalar_select %p332, %s26, 1
        %s334 = smul.addr %s333, 2
        %s335 = smul.addr %s334, 8
        %s336 = scalar_lea.vmem %s2, %s335
        %p337 = scmp.lt.s32.totalorder %s26, 1
        %s338 = scalar_select %p337, %s26, 1
        %s339 = scalar_lea.vmem %s3, %s338
        %v340 = vld [vmem:[%s331] sm:$0xff]
        %v341 = vld [vmem:[%s331 + $0x8] sm:$0xff]
        %v342 = vld [vmem:[%s279] sm:$0xff]
        %v343 = vld [vmem:[%s336] sm:$0xff]
        %v344 = vld [vmem:[%s336 + $0x8] sm:$0xff]
        %v345 = vld [vmem:[%s339] sm:$0x1]
        %v346 = vld [vmem:[#allocation6] sm:$0x1]
        %v347 = vld [vmem:[#allocation6 + $0x1] sm:$0x1]
        %v348 = vld [vmem:[#allocation6 + $0x2] sm:$0x1]
        %v349 = vld [vmem:[#allocation2] sm:$0x1]
        %v350 = vperm.slane %v346, 0
        %v351 = vmul.f32 %v340, %v350
        %v352 = vmul.f32 %v341, %v350
        %v353 = vperm.slane %v347, 0
        %v354 = vadd.f32 %v351, %v353
        %v355 = vadd.f32 %v352, %v353
        %v356 = vperm.slane %v348, 0
        %v357 = vmul.f32 %v340, %v356
        %v358 = vmul.f32 %v341, %v356
        %vm359 = vcmask 261120
        %v360 = vsel %vm359, %v357, 0.0
        %361 = vadd.xlane.f32.xlu0 %v360
        %v362 = vpop.xlane.xlu0 %361
        %v363 = vsel %vm359, %v358, 0.0
        %364 = vadd.xlane.f32.xlu0 %v363
        %v365 = vpop.xlane.xlu0 %364
        %v367 = vsel %vm359, %v354, 0
        %v370 = vsel %vm359, %v355, 0
        %v373 = vsel %vm359, %v342, 0
        %375 = vmatpush.xpose.msra.mxu0 0.0
        %376 = vmatpush.xpose.msra.mxu0 0.0
        %377 = vmatpush.xpose.msra.mxu0 0.0
        %378 = vmatpush.xpose.msra.mxu0 0.0
        %379 = vmatpush.xpose.msra.mxu0 0.0
        %380 = vmatpush.xpose.msra.mxu0 0.0
        %381 = vmatpush.xpose.msra.mxu0 0.0
        %382 = vmatpush.xpose.msra.mxu0 0.0
        %383 = vmatpush.xpose.msra.mxu0 0.0
        %384 = vmatpush.xpose.msra.mxu0 0.0
        %385 = vmatpush.xpose.msra.mxu0 0.0
        %386 = vmatpush.xpose.msra.mxu0 0.0
        %387 = vmatpush.xpose.msra.mxu0 0.0
        %388 = vmatpush.xpose.msra.mxu0 0.0
        %389 = vmatpush.xpose.msra.mxu0 0.0
        %390 = vmatpush.xpose.msra.mxu0 %v373
        %391 = vmatmul.f32.gmra.mxu0 %v367
        %v392 = vpop.f32.mrf.mxu0
        %v393 = vadd.f32 %v362, %v392
        %394 = vmatmul.f32.gmra.mxu0 %v370
        %v395 = vpop.f32.mrf.mxu0
        %v396 = vadd.f32 %v365, %v395
        %397 = vdwg.mxu0
        %v399 = vperm.slane %v349, 0
        %400 = vset.pattern.permute.xlu0 0
        %401 = vperm.xlu0 %400, %v399
        %v402 = vpop.permute.xlu0 %401
        %v404 = vadd.f32 %v393, %v402
        %v405 = vadd.f32 %v396, %v402
        %v407 = vperm.slane %v345, 0
        %v409 = vmul.f32 %v407, %v404
        %v410 = vmul.f32 %v407, %v405
        %v411 = vsub.f32 1.0, %v345
        %v412 = vmul.f32 %v411, -1e+30
        %v414 = vperm.slane %v412, 0
        %v416 = vadd.f32 %v409, %v414
        %v417 = vadd.f32 %v410, %v414
        %vm418 = vcmask 64512
        %v419 = vsel %vm418, %v416, -inf
        %420 = vmax.xlane.f32.xlu0 %v419
        %v421 = vpop.xlane.xlu0 %420
        %v422 = vsel %vm418, %v417, -inf
        %423 = vmax.xlane.f32.xlu0 %v422
        %v424 = vpop.xlane.xlu0 %423
        %v425 = vsub.f32 %v416, %v421
        %v426 = vsub.f32 %v417, %v424
        %v427 = vmul.f32 %v425, 1.442695
        %v428 = vpow.pop %v427
        %v429 = vmul.f32 %v426, 1.442695
        %v430 = vpow.pop %v429
        %v431 = vsel %vm418, %v428, 0.0
        %432 = vadd.xlane.f32.xlu0 %v431
        %v433 = vpop.xlane.xlu0 %432
        %v434 = vsel %vm418, %v430, 0.0
        %435 = vadd.xlane.f32.xlu0 %v434
        %v436 = vpop.xlane.xlu0 %435
        %v437 = vrcp.pop %v433
        %v438 = vmul.f32 %v433, %v437
        %v439 = vsub.f32 1.0, %v438
        %v440 = vmul.f32 %v437, %v439
        %v441 = vadd.f32 %v437, %v440
        %vm442 = vweird.f32 %v433
        %vm443 = vweird.f32 %v437
        %vm444 = vmor %vm442, %vm443
        %v445 = vsel %vm444, %v437, %v441
        %v446 = vand.u32 2147483647, %v433
        %vm447 = vcmp.eq.f32.partialorder %v446, 8.507059e+37
        %v448 = vand.u32 %v433, 2147483648
        %v449 = vor.u32 1.1754944e-38, %v448
        %v450 = vsel %vm447, %v449, %v445
        %v451 = vmul.f32 %v428, %v450
        %v452 = vrcp.pop %v436
        %v453 = vmul.f32 %v436, %v452
        %v454 = vsub.f32 1.0, %v453
        %v455 = vmul.f32 %v452, %v454
        %v456 = vadd.f32 %v452, %v455
        %vm457 = vweird.f32 %v436
        %vm458 = vweird.f32 %v452
        %vm459 = vmor %vm457, %vm458
        %v460 = vsel %vm459, %v452, %v456
        %v461 = vand.u32 2147483647, %v436
        %vm462 = vcmp.eq.f32.partialorder %v461, 8.507059e+37
        %v463 = vand.u32 %v436, 2147483648
        %v464 = vor.u32 1.1754944e-38, %v463
        %v465 = vsel %vm462, %v464, %v460
        %v466 = vmul.f32 %v430, %v465
        %468 = vset.pattern.permute.xlu0 0
        %469 = vperm.xlu0 %468, %v343
        %v470 = vpop.permute.xlu0 %469
        %473 = vset.pattern.permute.xlu0 0
        %474 = vperm.xlu0 %473, %v344
        %v475 = vpop.permute.xlu0 %474
        %v477 = vmul.f32 %v470, %v404
        %v478 = vmul.f32 %v475, %v405
        %v479 = vsub.f32 1.0, %v343
        %v480 = vsub.f32 1.0, %v344
        %v481 = vmul.f32 %v479, -1e+30
        %v482 = vmul.f32 %v480, -1e+30
        %484 = vset.pattern.permute.xlu0 0
        %485 = vperm.xlu0 %484, %v481
        %v486 = vpop.permute.xlu0 %485
        %489 = vset.pattern.permute.xlu0 0
        %490 = vperm.xlu0 %489, %v482
        %v491 = vpop.permute.xlu0 %490
        %v493 = vadd.f32 %v477, %v486
        %v494 = vadd.f32 %v478, %v491
        %v495 = vsel %vm418, %v493, -inf
        %v496 = vsel %vm418, %v494, -inf
        %v497 = vmax.f32 %v495, %v496
        %v498 = vrot.slane %v497, 4
        %v499 = vmax.f32 %v497, %v498
        %v500 = vrot.slane %v499, 2
        %v501 = vmax.f32 %v499, %v500
        %v502 = vrot.slane %v501, 1
        %v503 = vmax.f32 %v501, %v502
        %v504 = vsub.f32 %v493, %v503
        %v505 = vsub.f32 %v494, %v503
        %v506 = vmul.f32 %v504, 1.442695
        %v507 = vpow.pop %v506
        %v508 = vmul.f32 %v505, 1.442695
        %v509 = vpow.pop %v508
        %v510 = vsel %vm418, %v507, 0.0
        %v511 = vsel %vm418, %v509, 0.0
        %v512 = vadd.f32 %v510, %v511
        %v513 = vrot.slane %v512, 4
        %v514 = vadd.f32 %v512, %v513
        %v515 = vrot.slane %v514, 2
        %v516 = vadd.f32 %v514, %v515
        %v517 = vrot.slane %v516, 1
        %v518 = vadd.f32 %v516, %v517
        %v519 = vrcp.pop %v518
        %v520 = vmul.f32 %v518, %v519
        %v521 = vsub.f32 1.0, %v520
        %v522 = vmul.f32 %v519, %v521
        %v523 = vadd.f32 %v519, %v522
        %vm524 = vweird.f32 %v518
        %vm525 = vweird.f32 %v519
        %vm526 = vmor %vm524, %vm525
        %v527 = vsel %vm526, %v519, %v523
        %v528 = vand.u32 2147483647, %v518
        %vm529 = vcmp.eq.f32.partialorder %v528, 8.507059e+37
        %v530 = vand.u32 %v518, 2147483648
        %v531 = vor.u32 1.1754944e-38, %v530
        %v532 = vsel %vm529, %v531, %v527
        %v533 = vmul.f32 %v507, %v532
        %v534 = vmul.f32 %v509, %v532
        %v536 = vsel %vm418, %v451, 0
        %v539 = vsel %vm418, %v466, 0
        %541 = vmatpush.msra.mxu0 0.0
        %542 = vmatpush.msra.mxu0 0.0
        %543 = vmatpush.msra.mxu0 0.0
        %544 = vmatpush.msra.mxu0 0.0
        %545 = vmatpush.msra.mxu0 0.0
        %546 = vmatpush.msra.mxu0 0.0
        %547 = vmatpush.msra.mxu0 0.0
        %548 = vmatpush.msra.mxu0 0.0
        %549 = vmatpush.msra.mxu0 0.0
        %550 = vmatpush.msra.mxu0 0.0
        %551 = vmatpush.msra.mxu0 0.0
        %552 = vmatpush.msra.mxu0 0.0
        %553 = vmatpush.msra.mxu0 0.0
        %554 = vmatpush.msra.mxu0 0.0
        %555 = vmatpush.msra.mxu0 0.0
        %556 = vmatpush.msra.mxu0 %v342
        %557 = vmatmul.f32.gmra.mxu0 %v536
        %v558 = vpop.f32.mrf.mxu0
        %v559 = vadd.f32 0.0, %v558
        %560 = vmatmul.f32.gmra.mxu0 %v539
        %v561 = vpop.f32.mrf.mxu0
        %v562 = vadd.f32 0.0, %v561
        %563 = vdwg.mxu0
        %v565 = vsel %vm418, %v533, 0
        %v568 = vsel %vm418, %v534, 0
        %570 = vmatpush.xpose.msra.mxu0 0.0
        %571 = vmatpush.xpose.msra.mxu0 0.0
        %572 = vmatpush.xpose.msra.mxu0 0.0
        %573 = vmatpush.xpose.msra.mxu0 0.0
        %574 = vmatpush.xpose.msra.mxu0 0.0
        %575 = vmatpush.xpose.msra.mxu0 0.0
        %576 = vmatpush.xpose.msra.mxu0 0.0
        %577 = vmatpush.xpose.msra.mxu0 0.0
        %578 = vmatpush.xpose.msra.mxu0 0.0
        %579 = vmatpush.xpose.msra.mxu0 0.0
        %580 = vmatpush.xpose.msra.mxu0 0.0
        %581 = vmatpush.xpose.msra.mxu0 0.0
        %582 = vmatpush.xpose.msra.mxu0 0.0
        %583 = vmatpush.xpose.msra.mxu0 0.0
        %584 = vmatpush.xpose.msra.mxu0 %v568
        %585 = vmatpush.xpose.msra.mxu0 %v565
        %586 = vmatmul.f32.gmra.mxu0 %v536
        %v587 = vpop.f32.mrf.mxu0
        %v588 = vadd.f32 0.0, %v587
        %589 = vmatmul.f32.gmra.mxu0 %v539
        %v590 = vpop.f32.mrf.mxu0
        %v591 = vadd.f32 0.0, %v590
        %592 = vdwg.mxu0
        %vm593 = vcmask 130048
        %v595 = vsel %vm593, %v588, 0
        %v598 = vsel %vm593, %v591, 0
        %600 = vmatpush.msra.mxu0 0.0
        %601 = vmatpush.msra.mxu0 0.0
        %602 = vmatpush.msra.mxu0 0.0
        %603 = vmatpush.msra.mxu0 0.0
        %604 = vmatpush.msra.mxu0 0.0
        %605 = vmatpush.msra.mxu0 0.0
        %606 = vmatpush.msra.mxu0 0.0
        %607 = vmatpush.msra.mxu0 0.0
        %608 = vmatpush.msra.mxu0 0.0
        %609 = vmatpush.msra.mxu0 0.0
        %610 = vmatpush.msra.mxu0 0.0
        %611 = vmatpush.msra.mxu0 0.0
        %612 = vmatpush.msra.mxu0 0.0
        %613 = vmatpush.msra.mxu0 0.0
        %614 = vmatpush.msra.mxu0 %v341
        %615 = vmatpush.msra.mxu0 %v340
        %616 = vmatmul.f32.gmra.mxu0 %v595
        %v617 = vpop.f32.mrf.mxu0
        %v618 = vadd.f32 0.0, %v617
        %619 = vmatmul.f32.gmra.mxu0 %v598
        %v620 = vpop.f32.mrf.mxu0
        %v621 = vadd.f32 0.0, %v620
        %622 = vdwg.mxu0
        %v623 = vmul.f32 %v340, %v559
        %v624 = vmul.f32 %v341, %v562
        %v625 = vmul.f32 %v340, %v618
        %v626 = vmul.f32 %v341, %v621
        %629 = vrot.lane.b32.xlu0 %v559, 32
        %v630 = vpop.permute.xlu0 %629
        %631 = vrot.lane.b32.xlu0 %v562, 32
        %v632 = vpop.permute.xlu0 %631
        %637 = vrot.lane.b32.xlu0 %v623, 64
        %v638 = vpop.permute.xlu0 %637
        %639 = vrot.lane.b32.xlu0 %v624, 64
        %v640 = vpop.permute.xlu0 %639
        %645 = vrot.lane.b32.xlu0 %v625, 96
        %v646 = vpop.permute.xlu0 %645
        %647 = vrot.lane.b32.xlu0 %v626, 96
        %v648 = vpop.permute.xlu0 %647
        %v651 = vsel %vm359, %v340, %v630
        %v652 = vsel %vm359, %v341, %v632
        %vm653 = vcmask 523264
        %v654 = vsel %vm653, %v651, %v638
        %v655 = vsel %vm653, %v652, %v640
        %vm656 = vcmask 785408
        %v657 = vsel %vm656, %v654, %v646
        %v658 = vsel %vm656, %v655, %v648
        %659 = vst [vmem:[%s326] sm:$0xff] %v657
        %660 = vst [vmem:[%s326 + $0x8] sm:$0xff] %v658
        %s661 = sand.u32 %s180, 1
        %s662 = scalar_lea.sflag [#allocation5], %s661
        %s663 = sand.u32 %s180, 1
        %s664 = smul.addr %s663, 16
        %s665 = scalar_lea.vmem [#allocation8], %s664
        // Predicated region
        $region53: #{tpu_custom_call.1} parent=43 // pred_check
          %p666 = pneg %p190
        $region54: #{tpu_custom_call.1} parent=43 // pred_check_branch
          %668 = sbr.rel (%p666) target = $region56
        $region55: #{tpu_custom_call.1} parent=43 // pred_region
          %670 = vsyncadd %s662, 0
          %s671 = smul.addr %s26, 2
          %s672 = smul.addr %s671, 8
          %s673 = scalar_lea.hbm %s6, %s672
          %s674 = sshll.u32 %s665, 4
          %s675 = int_to_ptr.vmem [resolvable:$true] %s674
          %s676 = sshll.u32 %s673, 4
          %s677 = int_to_ptr.hbm [resolvable:$true] %s676
          %682 = dma.vmem_to_hbm [thread:$0]  %s675, 256, %s677, %s662, 128, 128, 8
        $region56: #{tpu_custom_call.1} parent=43 // pred_fallthru
          _
      $region44: #{tpu_custom_call.1} parent=5 // pred_fallthru
        _
      %p683 = scmp.le.s32.totalorder 2, %s21
      // Predicated region
      $region57: #{tpu_custom_call.1} parent=5 // pred_check
        %p684 = pneg %p683
      $region58: #{tpu_custom_call.1} parent=5 // pred_check_branch
        %686 = sbr.rel (%p684) target = $region60
      $region59: #{tpu_custom_call.1} parent=5 // pred_region
        %s687 = ssub.s32 %s21, 2
        // Predicated region
        $region61: #{tpu_custom_call.1} parent=59 // pred_check
          %p688 = pneg %p196
        $region62: #{tpu_custom_call.1} parent=59 // pred_check_branch
          %690 = sbr.rel (%p688) target = $region64
        $region63: #{tpu_custom_call.1} parent=59 // pred_region
          %s691 = sand.u32 %s181, 1
          %s692 = scalar_lea.sflag [#allocation5], %s691
          %s693 = sand.u32 %s181, 1
          %s694 = smul.addr %s693, 16
          %s695 = scalar_lea.vmem [#allocation8], %s694
          %697 = dma.done %s692, 256
        $region64: #{tpu_custom_call.1} parent=59 // pred_fallthru
          _
      $region60: #{tpu_custom_call.1} parent=5 // pred_fallthru
        _
    $region6: #{tpu_custom_call.1} parent=1 // loop_footer
      %s25 = sadd.s32 1, %s21
    $region7: #{tpu_custom_call.1} parent=1 // loop_footer_branch
      %20 = sbr.rel target = $region3
    $region8: #{tpu_custom_call.1} parent=1 // loop_exit
      _
    %698 = vsyncpa [#allocation4], 1
    %s699 = scalar_lea.sflag [#allocation4], 1
    %700 = vsyncpa %s699, 1
    %701 = vsyncpa [#allocation7], 1
    %702 = vsyncpa [#allocation5], 1
    %s703 = scalar_lea.sflag [#allocation5], 1
    %704 = vsyncpa %s703, 1

</llo_original>
